<compile_context>
chip_gen: v7x
topology: tpu7x:2x2x1
jax: 0.10.0
libtpu: 0.0.40
codegen_flags: <defaults>
</compile_context>

<pallas_src>
import functools

import jax
import jax.numpy as jnp
from jax.experimental import pallas as pl
from jax.experimental.pallas import tpu as pltpu

D_IN, D_H1, D_H2, D_OUT = 10, 20, 15, 5
LANE = 128        # lane width; hidden layers padded to this
D_OUT_PAD = 8     # output padded only to 8 (full last dim -> valid BlockSpec)


def _mlp_kernel(x_ref, w1_ref, b1_ref, w2_ref, b2_ref, w3_ref, b3_ref, o_ref):
    # One (TB, 10) batch tile; weights/biases are zero-padded and resident in
    # VMEM across all grid steps (constant index maps).
    x = x_ref[...]

    # Layer 1: Linear(10 -> 20, zero-padded to 128) + ReLU.
    # Padded columns: ReLU(0 + 0) == 0, so they stay exactly zero downstream.
    h1 = jnp.dot(x, w1_ref[...], preferred_element_type=jnp.float32) + b1_ref[...]
    h1 = jnp.maximum(h1, 0.0)

    # Layer 2: Linear(20 -> 15, padded to 128) + ReLU.
    h2 = jnp.dot(h1, w2_ref[...], preferred_element_type=jnp.float32) + b2_ref[...]
    h2 = jnp.maximum(h2, 0.0)

    # Layer 3: Linear(15 -> 5, padded to 8) + Sigmoid.  Padded logits are 0 ->
    # 0.5 after sigmoid; the wrapper slices them off.  Only 8 lanes are written
    # back to HBM (vs 128 before) -> ~16x less output DMA traffic.
    h3 = jnp.dot(h2, w3_ref[...], preferred_element_type=jnp.float32) + b3_ref[...]
    o_ref[...] = jax.nn.sigmoid(h3).astype(o_ref.dtype)


def _round_up(n, m):
    return ((n + m - 1) // m) * m


def _pad2d(a, rows, cols):
    r, c = a.shape
    return jnp.pad(a, ((0, rows - r), (0, cols - c)))


def prepare_params(params):
    """One-time lane-padding of the weights/biases (hoisted out of the forward).
    Weights are stored as (in, out), biases as (1, out)."""
    return {
        "w1": _pad2d(params["w1"], D_IN, LANE),
        "b1": _pad2d(params["b1"], 1, LANE),
        "w2": _pad2d(params["w2"], LANE, LANE),
        "b2": _pad2d(params["b2"], 1, LANE),
        "w3": _pad2d(params["w3"], LANE, D_OUT_PAD),
        "b3": _pad2d(params["b3"], 1, D_OUT_PAD),
    }


@functools.partial(jax.jit, static_argnames=("tb",))
def simple_nn_forward(x, padded_params, *, tb=2048):
    """x: (B, 10) float32.  padded_params: output of prepare_params()."""
    B = x.shape[0]

    # Batch tile: multiple of 8 (f32 sublanes), at most `tb`, and small enough
    # that the grid has >= 2 steps whenever B > 8, so the "parallel" batch axis
    # really shards across both v7x TensorCores (neutral on v5e/v6e).
    TB = min(tb, _round_up(pl.cdiv(B, 2), 8))
    grid = (pl.cdiv(B, TB),)

    w1, b1 = padded_params["w1"], padded_params["b1"]
    w2, b2 = padded_params["w2"], padded_params["b2"]
    w3, b3 = padded_params["w3"], padded_params["b3"]

    # VMEM budget with 128-lane terms (x tile, out tile and intermediates are
    # lane-padded to 128 inside VMEM).  Capped at 48 MiB to leave headroom on
    # v7x's 64 MiB VMEM (v5e/v6e have 128 MiB).
    vmem_bytes = (
        2 * TB * LANE * 4        # x tile (lane-padded), double-buffered
        + 2 * TB * LANE * 4      # out tile (lane-padded), double-buffered
        + 3 * LANE * LANE * 4    # resident weights
        + 3 * LANE * 4           # resident biases
        + 4 * TB * LANE * 4      # intermediates / compiler scratch
    )
    vmem_bytes = min(max(int(vmem_bytes) + (4 << 20), 16 << 20), 48 << 20)

    const = lambda r, c: pl.BlockSpec((r, c), lambda i: (0, 0))

    out_p = pl.pallas_call(
        _mlp_kernel,
        out_shape=jax.ShapeDtypeStruct((B, D_OUT_PAD), jnp.float32),
        grid=grid,
        in_specs=[
            pl.BlockSpec((TB, D_IN), lambda i: (i, 0)),  # x: streamed per tile
            const(D_IN, LANE),                            # w1 (resident)
            const(1, LANE),                               # b1
            const(LANE, LANE),                            # w2
            const(1, LANE),                               # b2
            const(LANE, D_OUT_PAD),                       # w3
            const(1, D_OUT_PAD),                          # b3
        ],
        out_specs=pl.BlockSpec((TB, D_OUT_PAD), lambda i: (i, 0)),
        compiler_params=pltpu.CompilerParams(
            dimension_semantics=("parallel",),
            vmem_limit_bytes=vmem_bytes,
        ),
    )(x, w1, b1, w2, b2, w3, b3)

    # Drop padded (sigmoid(0)=0.5) output columns; batch rows are already exact.
    return out_p[:, :D_OUT]


def init_params(key):
    """Deterministic init mimicking PyTorch nn.Linear default:
    U(-1/sqrt(fan_in), 1/sqrt(fan_in)) for both weight and bias.
    Weights are stored transposed as (in, out) for the kernel's x @ W layout."""
    def linear(key, fan_in, fan_out):
        kw, kb = jax.random.split(key)
        bound = 1.0 / jnp.sqrt(float(fan_in))
        w = jax.random.uniform(kw, (fan_in, fan_out), jnp.float32, -bound, bound)
        b = jax.random.uniform(kb, (1, fan_out), jnp.float32, -bound, bound)
        return w, b

    k1, k2, k3 = jax.random.split(key, 3)
    w1, b1 = linear(k1, D_IN, D_H1)
    w2, b2 = linear(k2, D_H1, D_H2)
    w3, b3 = linear(k3, D_H2, D_OUT)
    return {"w1": w1, "b1": b1, "w2": w2, "b2": b2, "w3": w3, "b3": b3}


def _reference(x, p):
    h = jnp.maximum(x @ p["w1"] + p["b1"], 0.0)
    h = jnp.maximum(h @ p["w2"] + p["b2"], 0.0)
    return jax.nn.sigmoid(h @ p["w3"] + p["b3"])


if __name__ == "__main__":
    key = jax.random.PRNGKey(0)
    kx, kx2, kp = jax.random.split(key, 3)
    params = init_params(kp)
    padded_params = jax.tree_util.tree_map(
        jax.block_until_ready, prepare_params(params))  # one-time param prep

    # Small batch.
    B = 8
    x = jax.random.normal(kx, (B, D_IN), dtype=jnp.float32)
    out = jax.block_until_ready(simple_nn_forward(x, padded_params))
    ref = _reference(x, params)
    assert out.shape == (B, D_OUT), out.shape
    assert jnp.allclose(out, ref, atol=1e-5, rtol=1e-5), "mismatch vs reference"

    # Batch not a multiple of the tile / sublane width (exercises the partial
    # last grid block: padded reads, dropped OOB writes).
    B2 = 13
    x2 = jax.random.normal(kx2, (B2, D_IN), dtype=jnp.float32)
    out2 = jax.block_until_ready(simple_nn_forward(x2, padded_params))
    ref2 = _reference(x2, params)
    assert out2.shape == (B2, D_OUT), out2.shape
    assert jnp.allclose(out2, ref2, atol=1e-5, rtol=1e-5), "mismatch vs reference (tail)"

    print("KERNEL_OK")
</pallas_src>

<mosaic_0001>
module attributes {stable_mosaic.version = 11 : i64} {
  func.func @_mlp_kernel(%arg0: i32, %arg1: memref<8x10xf32, #tpu.memory_space<vmem>>, %arg2: memref<10x128xf32, #tpu.memory_space<vmem>>, %arg3: memref<1x128xf32, #tpu.memory_space<vmem>>, %arg4: memref<128x128xf32, #tpu.memory_space<vmem>>, %arg5: memref<1x128xf32, #tpu.memory_space<vmem>>, %arg6: memref<128x8xf32, #tpu.memory_space<vmem>>, %arg7: memref<1x8xf32, #tpu.memory_space<vmem>>, %arg8: memref<8x8xf32, #tpu.memory_space<vmem>>) attributes {dimension_semantics = [#tpu.dimension_semantics<parallel>], iteration_bounds = array<i64: 1>, scalar_prefetch = 0 : i64, scratch_operands = 0 : i64, tpu.core_type = #tpu.core_type<tc>, window_params = [{transform_indices = @transform_0, window_bounds = array<i64: 8, 10>}, {pipeline_mode = #tpu.pipeline_mode<synchronous>, transform_indices = @transform_1, window_bounds = array<i64: 10, 128>}, {pipeline_mode = #tpu.pipeline_mode<synchronous>, transform_indices = @transform_2, window_bounds = array<i64: 1, 128>}, {pipeline_mode = #tpu.pipeline_mode<synchronous>, transform_indices = @transform_3, window_bounds = array<i64: 128, 128>}, {pipeline_mode = #tpu.pipeline_mode<synchronous>, transform_indices = @transform_4, window_bounds = array<i64: 1, 128>}, {pipeline_mode = #tpu.pipeline_mode<synchronous>, transform_indices = @transform_5, window_bounds = array<i64: 128, 8>}, {pipeline_mode = #tpu.pipeline_mode<synchronous>, transform_indices = @transform_6, window_bounds = array<i64: 1, 8>}, {transform_indices = @transform_7, window_bounds = array<i64: 8, 8>}]} {
    %c0 = arith.constant 0 : index
    %c0_0 = arith.constant 0 : index
    %0 = vector.load %arg1[%c0, %c0_0] : memref<8x10xf32, #tpu.memory_space<vmem>>, vector<8x10xf32>
    %c0_1 = arith.constant 0 : index
    %c0_2 = arith.constant 0 : index
    %1 = vector.load %arg2[%c0_1, %c0_2] : memref<10x128xf32, #tpu.memory_space<vmem>>, vector<10x128xf32>
    %cst = arith.constant dense<0.000000e+00> : vector<8x128xf32>
    %2 = tpu.matmul %0, %1, %cst {dimension_numbers = #tpu.dot_dimension_numbers<[1], [0], [0], [1], [0, 0, 1, 1], [], []>} : vector<8x10xf32>, vector<10x128xf32>, vector<8x128xf32> -> vector<8x128xf32>
    %c0_3 = arith.constant 0 : index
    %c0_4 = arith.constant 0 : index
    %3 = vector.load %arg3[%c0_3, %c0_4] : memref<1x128xf32, #tpu.memory_space<vmem>>, vector<1x128xf32>
    %4 = vector.broadcast %3 : vector<1x128xf32> to vector<8x128xf32>
    %5 = arith.addf %2, %4 : vector<8x128xf32>
    %cst_5 = arith.constant 0.000000e+00 : f32
    %6 = vector.broadcast %cst_5 : f32 to vector<8x128xf32>
    %7 = arith.maximumf %5, %6 : vector<8x128xf32>
    %c0_6 = arith.constant 0 : index
    %c0_7 = arith.constant 0 : index
    %8 = vector.load %arg4[%c0_6, %c0_7] : memref<128x128xf32, #tpu.memory_space<vmem>>, vector<128x128xf32>
    %cst_8 = arith.constant dense<0.000000e+00> : vector<8x128xf32>
    %9 = tpu.matmul %7, %8, %cst_8 {dimension_numbers = #tpu.dot_dimension_numbers<[1], [0], [0], [1], [0, 0, 1, 1], [], []>} : vector<8x128xf32>, vector<128x128xf32>, vector<8x128xf32> -> vector<8x128xf32>
    %c0_9 = arith.constant 0 : index
    %c0_10 = arith.constant 0 : index
    %10 = vector.load %arg5[%c0_9, %c0_10] : memref<1x128xf32, #tpu.memory_space<vmem>>, vector<1x128xf32>
    %11 = vector.broadcast %10 : vector<1x128xf32> to vector<8x128xf32>
    %12 = arith.addf %9, %11 : vector<8x128xf32>
    %cst_11 = arith.constant 0.000000e+00 : f32
    %13 = vector.broadcast %cst_11 : f32 to vector<8x128xf32>
    %14 = arith.maximumf %12, %13 : vector<8x128xf32>
    %c0_12 = arith.constant 0 : index
    %c0_13 = arith.constant 0 : index
    %15 = vector.load %arg6[%c0_12, %c0_13] : memref<128x8xf32, #tpu.memory_space<vmem>>, vector<128x8xf32>
    %cst_14 = arith.constant dense<0.000000e+00> : vector<8x8xf32>
    %16 = tpu.matmul %14, %15, %cst_14 {dimension_numbers = #tpu.dot_dimension_numbers<[1], [0], [0], [1], [0, 0, 1, 1], [], []>} : vector<8x128xf32>, vector<128x8xf32>, vector<8x8xf32> -> vector<8x8xf32>
    %c0_15 = arith.constant 0 : index
    %c0_16 = arith.constant 0 : index
    %17 = vector.load %arg7[%c0_15, %c0_16] : memref<1x8xf32, #tpu.memory_space<vmem>>, vector<1x8xf32>
    %18 = vector.broadcast %17 : vector<1x8xf32> to vector<8x8xf32>
    %19 = arith.addf %16, %18 : vector<8x8xf32>
    %20 = arith.negf %19 : vector<8x8xf32>
    %21 = math.exp %20 : vector<8x8xf32>
    %cst_17 = arith.constant 1.000000e+00 : f32
    %22 = vector.broadcast %cst_17 : f32 to vector<8x8xf32>
    %23 = arith.addf %22, %21 : vector<8x8xf32>
    %24 = arith.divf %22, %23 : vector<8x8xf32>
    %c0_18 = arith.constant 0 : index
    %c0_19 = arith.constant 0 : index
    %25 = vector.load %arg8[%c0_18, %c0_19] : memref<8x8xf32, #tpu.memory_space<vmem>>, vector<8x8xf32>
    tpu.vector_store %arg8[%c0_18, %c0_19], %24 {strides = array<i32>} : memref<8x8xf32, #tpu.memory_space<vmem>>, vector<8x8xf32>,
    return
  }
  func.func @transform_0(%arg0: i32) -> (i32, i32) {
    %c0_i32 = arith.constant 0 : i32
    %c0_i32_0 = arith.constant 0 : i32
    return %arg0, %c0_i32 : i32, i32
  }
  func.func @transform_1(%arg0: i32) -> (i32, i32) {
    %c0_i32 = arith.constant 0 : i32
    %c0_i32_0 = arith.constant 0 : i32
    %c0_i32_1 = arith.constant 0 : i32
    return %c0_i32, %c0_i32_0 : i32, i32
  }
  func.func @transform_2(%arg0: i32) -> (i32, i32) {
    %c0_i32 = arith.constant 0 : i32
    %c0_i32_0 = arith.constant 0 : i32
    %c0_i32_1 = arith.constant 0 : i32
    return %c0_i32, %c0_i32_0 : i32, i32
  }
  func.func @transform_3(%arg0: i32) -> (i32, i32) {
    %c0_i32 = arith.constant 0 : i32
    %c0_i32_0 = arith.constant 0 : i32
    %c0_i32_1 = arith.constant 0 : i32
    return %c0_i32, %c0_i32_0 : i32, i32
  }
  func.func @transform_4(%arg0: i32) -> (i32, i32) {
    %c0_i32 = arith.constant 0 : i32
    %c0_i32_0 = arith.constant 0 : i32
    %c0_i32_1 = arith.constant 0 : i32
    return %c0_i32, %c0_i32_0 : i32, i32
  }
  func.func @transform_5(%arg0: i32) -> (i32, i32) {
    %c0_i32 = arith.constant 0 : i32
    %c0_i32_0 = arith.constant 0 : i32
    %c0_i32_1 = arith.constant 0 : i32
    return %c0_i32, %c0_i32_0 : i32, i32
  }
  func.func @transform_6(%arg0: i32) -> (i32, i32) {
    %c0_i32 = arith.constant 0 : i32
    %c0_i32_0 = arith.constant 0 : i32
    %c0_i32_1 = arith.constant 0 : i32
    return %c0_i32, %c0_i32_0 : i32, i32
  }
  func.func @transform_7(%arg0: i32) -> (i32, i32) {
    %c0_i32 = arith.constant 0 : i32
    %c0_i32_0 = arith.constant 0 : i32
    return %arg0, %c0_i32 : i32, i32
  }
}

</mosaic_0001>

<llo_original>
// kernel: simple_nn_forward.1
$region0: #{simple_nn_forward.1}
  #allocation0 [shape = 'u32[]', space=smem, size = 0x4, offset = 0x4, fixed_abs, tag = 'smem constant byte address 0x4 - core index']
  #allocation1 [shape = 'u32[144,128]{1,0:T(1,128)}', space=vmem, size = 0x12000, scoped, tag = 'internal scratch']
  %s0 = inlined_call_operand.hbm [shape: f32[8,10], index: 0, kind: input, shape index: {}]
  %s1 = inlined_call_operand.vmem [shape: f32[10,128], index: 1, kind: input, shape index: {}]
  %s2 = inlined_call_operand.vmem [shape: f32[1,128], index: 2, kind: input, shape index: {}]
  %s3 = inlined_call_operand.vmem [shape: f32[128,128], index: 3, kind: input, shape index: {}]
  %s4 = inlined_call_operand.vmem [shape: f32[1,128], index: 4, kind: input, shape index: {}]
  %s5 = inlined_call_operand.vmem [shape: f32[128,8], index: 5, kind: input, shape index: {}]
  %s6 = inlined_call_operand.vmem [shape: f32[1,8], index: 6, kind: input, shape index: {}]
  %s7 = inlined_call_operand.hbm [shape: f32[8,8], index: 7, kind: output, shape index: {}]
  %s8 = sld [smem:[#allocation0]]
  $region42: #{simple_nn_forward.1} parent=0
    _
  %s10 = ssub.s32 1, %s8
  %s11 = scalar_select 0, %s10, %s8
  $region1: #{simple_nn_forward.1} parent=0
    #allocation2 [shape = 'u8[4096]{0}', space=vmem, size = 0x1000, scoped, tag = 'input window, operand 0, single buffered']
    #allocation3 [shape = 's32[1]{0}', space=sflag, size = 0x4, scoped, tag = 'scoped memory for simple_nn_forward.1']
    #allocation4 [shape = 's32[1]{0}', space=sflag, size = 0x4, scoped, tag = 'scoped memory for simple_nn_forward.1']
    #allocation5 [shape = 'u8[4096]{0}', space=vmem, size = 0x1000, scoped, tag = 'output window, operand 0, single buffered']
    %12 = vsyncpa [#allocation3], 0
    %13 = vsyncpa [#allocation4], 0
    // Predicated region
    $region2: #{simple_nn_forward.1} parent=1 // pred_check
      _
    $region3: #{simple_nn_forward.1} parent=1 // pred_check_branch
      %15 = sbr.rel (0) target = $region5
    $region4: #{simple_nn_forward.1} parent=1 // pred_region
      %s17 = ssub.s32 128, 128
      %18 = vsyncadd [#allocation3], %s17
      %s20 = sshll.u32 [#allocation2], 4
      %s21 = int_to_ptr.vmem [resolvable:$true] %s20
      %23 = dma.hbm_to_vmem [thread:$0]  %s0, 128, %s21, [#allocation3]
    $region5: #{simple_nn_forward.1} parent=1 // pred_fallthru
      _
    // Predicated region
    $region6: #{simple_nn_forward.1} parent=1 // pred_check
      _
    $region7: #{simple_nn_forward.1} parent=1 // pred_check_branch
      %25 = sbr.rel (0) target = $region9
    $region8: #{simple_nn_forward.1} parent=1 // pred_region
      _
    $region9: #{simple_nn_forward.1} parent=1 // pred_fallthru
      _
    // Predicated region
    $region10: #{simple_nn_forward.1} parent=1 // pred_check
      _
    $region11: #{simple_nn_forward.1} parent=1 // pred_check_branch
      %27 = sbr.rel (0) target = $region13
    $region12: #{simple_nn_forward.1} parent=1 // pred_region
      _
    $region13: #{simple_nn_forward.1} parent=1 // pred_fallthru
      _
    // Predicated region
    $region14: #{simple_nn_forward.1} parent=1 // pred_check
      _
    $region15: #{simple_nn_forward.1} parent=1 // pred_check_branch
      %29 = sbr.rel (0) target = $region17
    $region16: #{simple_nn_forward.1} parent=1 // pred_region
      _
    $region17: #{simple_nn_forward.1} parent=1 // pred_fallthru
      _
    // Predicated region
    $region18: #{simple_nn_forward.1} parent=1 // pred_check
      _
    $region19: #{simple_nn_forward.1} parent=1 // pred_check_branch
      %31 = sbr.rel (0) target = $region21
    $region20: #{simple_nn_forward.1} parent=1 // pred_region
      _
    $region21: #{simple_nn_forward.1} parent=1 // pred_fallthru
      _
    // Predicated region
    $region22: #{simple_nn_forward.1} parent=1 // pred_check
      _
    $region23: #{simple_nn_forward.1} parent=1 // pred_check_branch
      %33 = sbr.rel (0) target = $region25
    $region24: #{simple_nn_forward.1} parent=1 // pred_region
      _
    $region25: #{simple_nn_forward.1} parent=1 // pred_fallthru
      _
    // Predicated region
    $region26: #{simple_nn_forward.1} parent=1 // pred_check
      _
    $region27: #{simple_nn_forward.1} parent=1 // pred_check_branch
      %35 = sbr.rel (0) target = $region29
    $region28: #{simple_nn_forward.1} parent=1 // pred_region
      _
    $region29: #{simple_nn_forward.1} parent=1 // pred_fallthru
      _
    // Predicated region
    $region30: #{simple_nn_forward.1} parent=1 // pred_check
      _
    $region31: #{simple_nn_forward.1} parent=1 // pred_check_branch
      %37 = sbr.rel (0) target = $region33
    $region32: #{simple_nn_forward.1} parent=1 // pred_region
      %38 = dma.done [#allocation3], 128
    $region33: #{simple_nn_forward.1} parent=1 // pred_fallthru
      _
    %v39 = vld [vmem:[#allocation2] sm:$0xff]
    %v40 = vld [vmem:[%s1] sm:$0xff]
    %v41 = vld [vmem:[%s1 + $0x8] sm:$0x3]
    %v42 = vld [vmem:[%s2] sm:$0x1]
    %v44 = vlaneseq
    %v45 = vshrl.u32 %v44, 7
    %v46 = vsub.s32 0, %v45
    %v47 = vrot.slane %v42, %v46
    %vm49 = vcmask 80896
    %v51 = vsel %vm49, %v39, 0
    %vm53 = vcmask 1041408
    %v55 = vsel %vm53, %v41, 0
    %57 = vmatprep.subr.mxu0 0.0
    %58 = vmatpush1.msra.mxu0 %v40
    %59 = vmatprep.subr.mxu0 0.0
    %60 = vmatpush1.msra.mxu0 %v55
    %61 = vmatprep.subr.mxu0 0.0
    %62 = vmatpush1.msra.mxu0 0.0
    %63 = vmatprep.subr.mxu0 0.0
    %64 = vmatpush1.msra.mxu0 0.0
    %65 = vmatprep.subr.mxu0 0.0
    %66 = vmatpush1.msra.mxu0 0.0
    %67 = vmatprep.subr.mxu0 0.0
    %68 = vmatpush1.msra.mxu0 0.0
    %69 = vmatprep.subr.mxu0 0.0
    %70 = vmatpush1.msra.mxu0 0.0
    %71 = vmatprep.subr.mxu0 0.0
    %72 = vmatpush1.msra.mxu0 0.0
    %73 = vmatprep.subr.mxu0 0.0
    %74 = vmatpush1.msra.mxu0 0.0
    %75 = vmatprep.subr.mxu0 0.0
    %76 = vmatpush1.msra.mxu0 0.0
    %77 = vmatprep.subr.mxu0 0.0
    %78 = vmatpush1.msra.mxu0 0.0
    %79 = vmatprep.subr.mxu0 0.0
    %80 = vmatpush1.msra.mxu0 0.0
    %81 = vmatprep.subr.mxu0 0.0
    %82 = vmatpush1.msra.mxu0 0.0
    %83 = vmatprep.subr.mxu0 0.0
    %84 = vmatpush1.msra.mxu0 0.0
    %85 = vmatprep.subr.mxu0 0.0
    %86 = vmatpush1.msra.mxu0 0.0
    %87 = vmatprep.subr.mxu0 0.0
    %88 = vmatpush1.msra.mxu0 0.0
    %89 = vmatprep.subr.mxu0 0.0
    %90 = vmatpush1.msra.mxu0 0.0
    %91 = vmatprep.subr.mxu0 0.0
    %92 = vmatpush1.msra.mxu0 0.0
    %93 = vmatprep.subr.mxu0 0.0
    %94 = vmatpush1.msra.mxu0 0.0
    %95 = vmatprep.subr.mxu0 0.0
    %96 = vmatpush1.msra.mxu0 0.0
    %97 = vmatprep.subr.mxu0 0.0
    %98 = vmatpush1.msra.mxu0 0.0
    %99 = vmatprep.subr.mxu0 0.0
    %100 = vmatpush1.msra.mxu0 0.0
    %101 = vmatprep.subr.mxu0 0.0
    %102 = vmatpush1.msra.mxu0 0.0
    %103 = vmatprep.subr.mxu0 0.0
    %104 = vmatpush1.msra.mxu0 0.0
    %105 = vmatprep.subr.mxu0 0.0
    %106 = vmatpush1.msra.mxu0 0.0
    %107 = vmatprep.subr.mxu0 0.0
    %108 = vmatpush1.msra.mxu0 0.0
    %109 = vmatprep.subr.mxu0 0.0
    %110 = vmatpush1.msra.mxu0 0.0
    %111 = vmatprep.subr.mxu0 0.0
    %112 = vmatpush1.msra.mxu0 0.0
    %113 = vmatprep.subr.mxu0 0.0
    %114 = vmatpush1.msra.mxu0 0.0
    %115 = vmatprep.subr.mxu0 0.0
    %116 = vmatpush1.msra.mxu0 0.0
    %117 = vmatprep.subr.mxu0 0.0
    %118 = vmatpush1.msra.mxu0 0.0
    %119 = vmatprep.subr.mxu0 0.0
    %120 = vmatpush1.msra.mxu0 0.0
    %121 = vmatprep.mubr.f32.mxu0 0.0
    %122 = vmatmul.mubr.f32.gmra.mrb[0].mxu0 %v51
    %v123 = vpop.f32.mrb[0].mxu0
    %v124 = vadd.f32 %v47, %v123
    %v125 = vpop.f32.mrb[0].mxu0
    %126 = vdwg.mxu0
    %v127 = vmax.f32 %v124, 0.0
    %v128 = vld [vmem:[%s3] sm:$0xff]
    %v129 = vld [vmem:[%s3 + $0x8] sm:$0xff]
    %v130 = vld [vmem:[%s3 + $0x10] sm:$0xff]
    %v131 = vld [vmem:[%s3 + $0x18] sm:$0xff]
    %v132 = vld [vmem:[%s3 + $0x20] sm:$0xff]
    %v133 = vld [vmem:[%s3 + $0x28] sm:$0xff]
    %v134 = vld [vmem:[%s3 + $0x30] sm:$0xff]
    %v135 = vld [vmem:[%s3 + $0x38] sm:$0xff]
    %v136 = vld [vmem:[%s3 + $0x40] sm:$0xff]
    %v137 = vld [vmem:[%s3 + $0x48] sm:$0xff]
    %v138 = vld [vmem:[%s3 + $0x50] sm:$0xff]
    %v139 = vld [vmem:[%s3 + $0x58] sm:$0xff]
    %v140 = vld [vmem:[%s3 + $0x60] sm:$0xff]
    %v141 = vld [vmem:[%s3 + $0x68] sm:$0xff]
    %v142 = vld [vmem:[%s3 + $0x70] sm:$0xff]
    %v143 = vld [vmem:[%s3 + $0x78] sm:$0xff]
    %v144 = vld [vmem:[%s4] sm:$0x1]
    %v146 = vlaneseq
    %v147 = vshrl.u32 %v146, 7
    %v148 = vsub.s32 0, %v147
    %v149 = vrot.slane %v144, %v148
    %151 = vmatprep.subr.mxu0 0.0
    %152 = vmatpush1.msra.mxu0 %v128
    %153 = vmatprep.subr.mxu0 0.0
    %154 = vmatpush1.msra.mxu0 %v129
    %155 = vmatprep.subr.mxu0 0.0
    %156 = vmatpush1.msra.mxu0 %v130
    %157 = vmatprep.subr.mxu0 0.0
    %158 = vmatpush1.msra.mxu0 %v131
    %159 = vmatprep.subr.mxu0 0.0
    %160 = vmatpush1.msra.mxu0 %v132
    %161 = vmatprep.subr.mxu0 0.0
    %162 = vmatpush1.msra.mxu0 %v133
    %163 = vmatprep.subr.mxu0 0.0
    %164 = vmatpush1.msra.mxu0 %v134
    %165 = vmatprep.subr.mxu0 0.0
    %166 = vmatpush1.msra.mxu0 %v135
    %167 = vmatprep.subr.mxu0 0.0
    %168 = vmatpush1.msra.mxu0 %v136
    %169 = vmatprep.subr.mxu0 0.0
    %170 = vmatpush1.msra.mxu0 %v137
    %171 = vmatprep.subr.mxu0 0.0
    %172 = vmatpush1.msra.mxu0 %v138
    %173 = vmatprep.subr.mxu0 0.0
    %174 = vmatpush1.msra.mxu0 %v139
    %175 = vmatprep.subr.mxu0 0.0
    %176 = vmatpush1.msra.mxu0 %v140
    %177 = vmatprep.subr.mxu0 0.0
    %178 = vmatpush1.msra.mxu0 %v141
    %179 = vmatprep.subr.mxu0 0.0
    %180 = vmatpush1.msra.mxu0 %v142
    %181 = vmatprep.subr.mxu0 0.0
    %182 = vmatpush1.msra.mxu0 %v143
    %183 = vmatprep.subr.mxu0 0.0
    %184 = vmatpush1.msra.mxu0 0.0
    %185 = vmatprep.subr.mxu0 0.0
    %186 = vmatpush1.msra.mxu0 0.0
    %187 = vmatprep.subr.mxu0 0.0
    %188 = vmatpush1.msra.mxu0 0.0
    %189 = vmatprep.subr.mxu0 0.0
    %190 = vmatpush1.msra.mxu0 0.0
    %191 = vmatprep.subr.mxu0 0.0
    %192 = vmatpush1.msra.mxu0 0.0
    %193 = vmatprep.subr.mxu0 0.0
    %194 = vmatpush1.msra.mxu0 0.0
    %195 = vmatprep.subr.mxu0 0.0
    %196 = vmatpush1.msra.mxu0 0.0
    %197 = vmatprep.subr.mxu0 0.0
    %198 = vmatpush1.msra.mxu0 0.0
    %199 = vmatprep.subr.mxu0 0.0
    %200 = vmatpush1.msra.mxu0 0.0
    %201 = vmatprep.subr.mxu0 0.0
    %202 = vmatpush1.msra.mxu0 0.0
    %203 = vmatprep.subr.mxu0 0.0
    %204 = vmatpush1.msra.mxu0 0.0
    %205 = vmatprep.subr.mxu0 0.0
    %206 = vmatpush1.msra.mxu0 0.0
    %207 = vmatprep.subr.mxu0 0.0
    %208 = vmatpush1.msra.mxu0 0.0
    %209 = vmatprep.subr.mxu0 0.0
    %210 = vmatpush1.msra.mxu0 0.0
    %211 = vmatprep.subr.mxu0 0.0
    %212 = vmatpush1.msra.mxu0 0.0
    %213 = vmatprep.subr.mxu0 0.0
    %214 = vmatpush1.msra.mxu0 0.0
    %215 = vmatprep.mubr.f32.mxu0 0.0
    %216 = vmatmul.mubr.f32.gmra.mrb[0].mxu0 %v127
    %v217 = vpop.f32.mrb[0].mxu0
    %v218 = vadd.f32 %v149, %v217
    %v219 = vpop.f32.mrb[0].mxu0
    %220 = vdwg.mxu0
    %v221 = vmax.f32 %v218, 0.0
    %v222 = vld [vmem:[%s5] sm:$0xff]
    %v223 = vld [vmem:[%s5 + $0x8] sm:$0xff]
    %v224 = vld [vmem:[%s5 + $0x10] sm:$0xff]
    %v225 = vld [vmem:[%s5 + $0x18] sm:$0xff]
    %v226 = vld [vmem:[%s5 + $0x20] sm:$0xff]
    %v227 = vld [vmem:[%s5 + $0x28] sm:$0xff]
    %v228 = vld [vmem:[%s5 + $0x30] sm:$0xff]
    %v229 = vld [vmem:[%s5 + $0x38] sm:$0xff]
    %v230 = vld [vmem:[%s5 + $0x40] sm:$0xff]
    %v231 = vld [vmem:[%s5 + $0x48] sm:$0xff]
    %v232 = vld [vmem:[%s5 + $0x50] sm:$0xff]
    %v233 = vld [vmem:[%s5 + $0x58] sm:$0xff]
    %v234 = vld [vmem:[%s5 + $0x60] sm:$0xff]
    %v235 = vld [vmem:[%s5 + $0x68] sm:$0xff]
    %v236 = vld [vmem:[%s5 + $0x70] sm:$0xff]
    %v237 = vld [vmem:[%s5 + $0x78] sm:$0xff]
    %v238 = vld [vmem:[%s6] sm:$0x1]
    %v240 = vlaneseq
    %v241 = vshrl.u32 %v240, 7
    %v242 = vsub.s32 0, %v241
    %v243 = vrot.slane %v238, %v242
    %245 = vmatprep.subr.mxu0 0.0
    %246 = vmatpush1.msra.mxu0 %v222
    %247 = vmatprep.subr.mxu0 0.0
    %248 = vmatpush1.msra.mxu0 %v223
    %249 = vmatprep.subr.mxu0 0.0
    %250 = vmatpush1.msra.mxu0 %v224
    %251 = vmatprep.subr.mxu0 0.0
    %252 = vmatpush1.msra.mxu0 %v225
    %253 = vmatprep.subr.mxu0 0.0
    %254 = vmatpush1.msra.mxu0 %v226
    %255 = vmatprep.subr.mxu0 0.0
    %256 = vmatpush1.msra.mxu0 %v227
    %257 = vmatprep.subr.mxu0 0.0
    %258 = vmatpush1.msra.mxu0 %v228
    %259 = vmatprep.subr.mxu0 0.0
    %260 = vmatpush1.msra.mxu0 %v229
    %261 = vmatprep.subr.mxu0 0.0
    %262 = vmatpush1.msra.mxu0 %v230
    %263 = vmatprep.subr.mxu0 0.0
    %264 = vmatpush1.msra.mxu0 %v231
    %265 = vmatprep.subr.mxu0 0.0
    %266 = vmatpush1.msra.mxu0 %v232
    %267 = vmatprep.subr.mxu0 0.0
    %268 = vmatpush1.msra.mxu0 %v233
    %269 = vmatprep.subr.mxu0 0.0
    %270 = vmatpush1.msra.mxu0 %v234
    %271 = vmatprep.subr.mxu0 0.0
    %272 = vmatpush1.msra.mxu0 %v235
    %273 = vmatprep.subr.mxu0 0.0
    %274 = vmatpush1.msra.mxu0 %v236
    %275 = vmatprep.subr.mxu0 0.0
    %276 = vmatpush1.msra.mxu0 %v237
    %277 = vmatprep.subr.mxu0 0.0
    %278 = vmatpush1.msra.mxu0 0.0
    %279 = vmatprep.subr.mxu0 0.0
    %280 = vmatpush1.msra.mxu0 0.0
    %281 = vmatprep.subr.mxu0 0.0
    %282 = vmatpush1.msra.mxu0 0.0
    %283 = vmatprep.subr.mxu0 0.0
    %284 = vmatpush1.msra.mxu0 0.0
    %285 = vmatprep.subr.mxu0 0.0
    %286 = vmatpush1.msra.mxu0 0.0
    %287 = vmatprep.subr.mxu0 0.0
    %288 = vmatpush1.msra.mxu0 0.0
    %289 = vmatprep.subr.mxu0 0.0
    %290 = vmatpush1.msra.mxu0 0.0
    %291 = vmatprep.subr.mxu0 0.0
    %292 = vmatpush1.msra.mxu0 0.0
    %293 = vmatprep.subr.mxu0 0.0
    %294 = vmatpush1.msra.mxu0 0.0
    %295 = vmatprep.subr.mxu0 0.0
    %296 = vmatpush1.msra.mxu0 0.0
    %297 = vmatprep.subr.mxu0 0.0
    %298 = vmatpush1.msra.mxu0 0.0
    %299 = vmatprep.subr.mxu0 0.0
    %300 = vmatpush1.msra.mxu0 0.0
    %301 = vmatprep.subr.mxu0 0.0
    %302 = vmatpush1.msra.mxu0 0.0
    %303 = vmatprep.subr.mxu0 0.0
    %304 = vmatpush1.msra.mxu0 0.0
    %305 = vmatprep.subr.mxu0 0.0
    %306 = vmatpush1.msra.mxu0 0.0
    %307 = vmatprep.subr.mxu0 0.0
    %308 = vmatpush1.msra.mxu0 0.0
    %309 = vmatprep.mubr.f32.mxu0 0.0
    %310 = vmatmul.mubr.f32.gmra.mrb[0].mxu0 %v221
    %v311 = vpop.f32.mrb[0].mxu0
    %v312 = vadd.f32 %v243, %v311
    %v313 = vpop.f32.mrb[0].mxu0
    %314 = vdwg.mxu0
    %v315 = vxor.u32 %v312, 2147483648
    %v316 = vmul.f32 %v315, 1.442695
    %v317 = vpow.pop %v316
    %v318 = vadd.f32 %v317, 1.0
    %v319 = vrcp.pop %v318
    %v320 = vmul.f32 1.0, %v319
    %vm321 = vcmask 64512
    %322 = vst.msk [vmem:[#allocation5] sm:$0xff] %vm321, %v320
    // Predicated region
    $region34: #{simple_nn_forward.1} parent=1 // pred_check
      _
    $region35: #{simple_nn_forward.1} parent=1 // pred_check_branch
      %324 = sbr.rel (0) target = $region37
    $region36: #{simple_nn_forward.1} parent=1 // pred_region
      %s326 = ssub.s32 128, 128
      %327 = vsyncadd [#allocation4], %s326
      %s329 = sshll.u32 [#allocation5], 4
      %s330 = int_to_ptr.vmem [resolvable:$true] %s329
      %332 = dma.vmem_to_hbm [thread:$0]  %s330, 128, %s7, [#allocation4]
    $region37: #{simple_nn_forward.1} parent=1 // pred_fallthru
      _
    // Predicated region
    $region38: #{simple_nn_forward.1} parent=1 // pred_check
      _
    $region39: #{simple_nn_forward.1} parent=1 // pred_check_branch
      %334 = sbr.rel (0) target = $region41
    $region40: #{simple_nn_forward.1} parent=1 // pred_region
      %335 = dma.done [#allocation4], 128
    $region41: #{simple_nn_forward.1} parent=1 // pred_fallthru
      _
    %336 = vsyncpa [#allocation3], 1
    %337 = vsyncpa [#allocation4], 1

</llo_original>
